<compile_context>
chip_gen: v7x
topology: tpu7x:2x2x1
jax: 0.10.0
libtpu: 0.0.40
codegen_flags: <defaults>
</compile_context>

<pallas_src>
import functools

import jax
import jax.numpy as jnp
from jax.experimental import pallas as pl
from jax.experimental.pallas import tpu as pltpu

_LANES = 128          # one lane tile; also 2 * hidden1
_H1, _H2 = 64, 32     # actor/critic hidden widths (from the PyTorch module)


def _round_up(n, m):
    return ((n + m - 1) // m) * m


def _actor_critic_kernel(x_ref, slab_ref, out_ref, *, input_dim, output_dim, offs):
    """One batch tile of the fused actor+critic MLP.

    slab_ref packs the 6 fused (block-diagonal, 128-lane padded) weight/bias
    tensors stacked along rows; the static slices below are free VMEM views.
    """
    x = x_ref[...]                                          # (TB, input_dim) f32

    w1 = slab_ref[offs["w1"]:offs["w1"] + input_dim, :]     # (in, 128)  [w1a | w1c]
    b1 = slab_ref[offs["b1"]:offs["b1"] + 1, :]             # (1, 128)
    w2 = slab_ref[offs["w2"]:offs["w2"] + _LANES, :]        # (128, 128) blockdiag(w2a, w2c)
    b2 = slab_ref[offs["b2"]:offs["b2"] + 1, :]
    w3 = slab_ref[offs["w3"]:offs["w3"] + _LANES, :]        # (128, 128) blockdiag(w3a, w3c)
    b3 = slab_ref[offs["b3"]:offs["b3"] + 1, :]

    col = jax.lax.broadcasted_iota(jnp.int32, (x.shape[0], _LANES), 1)

    # Fused layer 1: lanes [0,64) = actor -> tanh, lanes [64,128) = critic -> relu.
    h1 = jnp.dot(x, w1, preferred_element_type=jnp.float32) + b1
    h1 = jnp.where(col < _H1, jnp.tanh(h1), jnp.maximum(h1, 0.0))

    # Fused layer 2: lanes [0,32) actor -> tanh, [32,64) critic -> relu,
    # lanes [64,128) are exact zeros and stay zero under relu.
    h2 = jnp.dot(h1, w2, preferred_element_type=jnp.float32) + b2
    h2 = jnp.where(col < _H2, jnp.tanh(h2), jnp.maximum(h2, 0.0))

    # Fused layer 3: lanes [0,out_dim) = actor logits, lane out_dim = value.
    z3 = jnp.dot(h2, w3, preferred_element_type=jnp.float32) + b3

    # Masked, max-stabilized softmax over the logit lanes only.
    probs_mask = col < output_dim
    zs = jnp.where(probs_mask, z3, -jnp.inf)
    m = jnp.max(zs, axis=-1, keepdims=True)
    e = jnp.exp(zs - m)                                     # masked lanes -> exp(-inf) = 0
    denom = jnp.sum(e, axis=-1, keepdims=True)
    probs = e * pl.reciprocal(denom, approx=False)          # exact; approx misses 1e-5 tol

    # Single lane-dense output slab: probs in [0,out_dim), value at lane out_dim.
    out_ref[...] = probs + jnp.where(col == output_dim, z3, 0.0)


def pack_params(params, input_dim, output_dim):
    """Pack all actor/critic weights+biases into one (rows, 128) f32 slab."""
    in_rows = _round_up(max(input_dim, 1), 8)

    w1 = jnp.zeros((in_rows, _LANES), jnp.float32)
    w1 = w1.at[:input_dim, :_H1].set(params["w1a"])
    w1 = w1.at[:input_dim, _H1:2 * _H1].set(params["w1c"])
    b1 = jnp.zeros((8, _LANES), jnp.float32)
    b1 = b1.at[0, :_H1].set(params["b1a"][0])
    b1 = b1.at[0, _H1:2 * _H1].set(params["b1c"][0])

    w2 = jnp.zeros((_LANES, _LANES), jnp.float32)
    w2 = w2.at[:_H1, :_H2].set(params["w2a"])
    w2 = w2.at[_H1:2 * _H1, _H2:2 * _H2].set(params["w2c"])
    b2 = jnp.zeros((8, _LANES), jnp.float32)
    b2 = b2.at[0, :_H2].set(params["b2a"][0])
    b2 = b2.at[0, _H2:2 * _H2].set(params["b2c"][0])

    w3 = jnp.zeros((_LANES, _LANES), jnp.float32)
    w3 = w3.at[:_H2, :output_dim].set(params["w3a"])
    w3 = w3.at[_H2:2 * _H2, output_dim:output_dim + 1].set(params["w3c"])
    b3 = jnp.zeros((8, _LANES), jnp.float32)
    b3 = b3.at[0, :output_dim].set(params["b3a"][0])
    b3 = b3.at[0, output_dim].set(params["b3c"][0, 0])

    slab = jnp.concatenate([w1, b1, w2, b2, w3, b3], axis=0)
    offs = {
        "w1": 0,
        "b1": in_rows,
        "w2": in_rows + 8,
        "b2": in_rows + 8 + _LANES,
        "w3": in_rows + 16 + _LANES,
        "b3": in_rows + 16 + 2 * _LANES,
    }
    return slab, offs


def actor_critic_forward(x, params, *, tile_b=512):
    """x: (batch, input_dim) float32. Returns (act_probs, value)."""
    batch, input_dim = x.shape
    output_dim = params["w3a"].shape[1]
    assert output_dim + 1 <= _LANES, "output_dim must fit in one lane tile"

    slab, offs = pack_params(params, input_dim, output_dim)
    slab_rows = slab.shape[0]

    # Batch tiling: tiny batches run in one grid step; large batches pipeline.
    tb = min(tile_b, _round_up(batch, 8))
    padded = _round_up(batch, tb)
    if padded != batch:
        x = jnp.pad(x, ((0, padded - batch), (0, 0)))
    grid = (padded // tb,)

    kernel = functools.partial(
        _actor_critic_kernel, input_dim=input_dim, output_dim=output_dim, offs=offs
    )

    out = pl.pallas_call(
        kernel,
        out_shape=jax.ShapeDtypeStruct((padded, _LANES), jnp.float32),
        grid=grid,
        in_specs=[
            pl.BlockSpec((tb, input_dim), lambda i: (i, 0)),
            # Weight slab: constant block index -> resident across grid steps.
            pl.BlockSpec((slab_rows, _LANES), lambda i: (0, 0)),
        ],
        out_specs=pl.BlockSpec((tb, _LANES), lambda i: (i, 0)),
        compiler_params=pltpu.CompilerParams(dimension_semantics=("parallel",)),
    )(x, slab)

    probs = out[:batch, :output_dim]
    value = out[:batch, output_dim:output_dim + 1]
    return probs, value


def init_params(key, input_dim, output_dim):
    """PyTorch-Linear-style init (uniform +-1/sqrt(fan_in)), weights stored
    as (in_features, out_features)."""
    dims_actor = [(input_dim, 64), (64, 32), (32, output_dim)]
    dims_critic = [(input_dim, 64), (64, 32), (32, 1)]
    params = {}
    names = ["1a", "2a", "3a", "1c", "2c", "3c"]
    all_dims = dims_actor + dims_critic
    keys = jax.random.split(key, 2 * len(all_dims))
    for i, (name, (fin, fout)) in enumerate(zip(names, all_dims)):
        bound = 1.0 / (fin ** 0.5)
        params["w" + name] = jax.random.uniform(
            keys[2 * i], (fin, fout), jnp.float32, -bound, bound
        )
        params["b" + name] = jax.random.uniform(
            keys[2 * i + 1], (1, fout), jnp.float32, -bound, bound
        )
    return params


def _reference_forward(x, p):
    h = jnp.tanh(x @ p["w1a"] + p["b1a"])
    h = jnp.tanh(h @ p["w2a"] + p["b2a"])
    logits = h @ p["w3a"] + p["b3a"]
    probs = jax.nn.softmax(logits, axis=-1)
    c = jax.nn.relu(x @ p["w1c"] + p["b1c"])
    c = jax.nn.relu(c @ p["w2c"] + p["b2c"])
    v = c @ p["w3c"] + p["b3c"]
    return probs, v


# TODO(synk): act()/eval() (Categorical sampling, log_prob, entropy, reward
# bookkeeping) are host-side RL plumbing and are not part of this kernel.

if __name__ == "__main__":
    key = jax.random.PRNGKey(0)
    k_x, k_p = jax.random.split(key)

    batch, input_dim, output_dim = 8, 4, 6
    x = jax.random.normal(k_x, (batch, input_dim), jnp.float32)
    params = init_params(k_p, input_dim, output_dim)

    probs, value = actor_critic_forward(x, params)
    probs = jax.block_until_ready(probs)
    value = jax.block_until_ready(value)

    ref_probs, ref_value = _reference_forward(x, params)
    assert probs.shape == (batch, output_dim)
    assert value.shape == (batch, 1)
    assert jnp.allclose(probs, ref_probs, atol=1e-5, rtol=1e-5)
    assert jnp.allclose(value, ref_value, atol=1e-5, rtol=1e-5)
    assert jnp.allclose(jnp.sum(probs, axis=-1), 1.0, atol=1e-5)

    print("KERNEL_OK")
</pallas_src>

<mosaic_0001>
module attributes {stable_mosaic.version = 11 : i64} {
  func.func @_actor_critic_kernel(%arg0: i32, %arg1: memref<8x4xf32, #tpu.memory_space<vmem>>, %arg2: memref<288x128xf32, #tpu.memory_space<vmem>>, %arg3: memref<8x128xf32, #tpu.memory_space<vmem>>) attributes {dimension_semantics = [#tpu.dimension_semantics<parallel>], iteration_bounds = array<i64: 1>, scalar_prefetch = 0 : i64, scratch_operands = 0 : i64, tpu.core_type = #tpu.core_type<tc>, window_params = [{transform_indices = @transform_0, window_bounds = array<i64: 8, 4>}, {pipeline_mode = #tpu.pipeline_mode<synchronous>, transform_indices = @transform_1, window_bounds = array<i64: 288, 128>}, {transform_indices = @transform_2, window_bounds = array<i64: 8, 128>}]} {
    %c0 = arith.constant 0 : index
    %c0_0 = arith.constant 0 : index
    %0 = vector.load %arg1[%c0, %c0_0] : memref<8x4xf32, #tpu.memory_space<vmem>>, vector<8x4xf32>
    %c0_1 = arith.constant 0 : index
    %c0_2 = arith.constant 0 : index
    %1 = vector.load %arg2[%c0_1, %c0_2] : memref<288x128xf32, #tpu.memory_space<vmem>>, vector<4x128xf32>
    %c8 = arith.constant 8 : index
    %c0_3 = arith.constant 0 : index
    %2 = vector.load %arg2[%c8, %c0_3] : memref<288x128xf32, #tpu.memory_space<vmem>>, vector<1x128xf32>
    %c16 = arith.constant 16 : index
    %c0_4 = arith.constant 0 : index
    %3 = vector.load %arg2[%c16, %c0_4] : memref<288x128xf32, #tpu.memory_space<vmem>>, vector<128x128xf32>
    %c144 = arith.constant 144 : index
    %c0_5 = arith.constant 0 : index
    %4 = vector.load %arg2[%c144, %c0_5] : memref<288x128xf32, #tpu.memory_space<vmem>>, vector<1x128xf32>
    %c152 = arith.constant 152 : index
    %c0_6 = arith.constant 0 : index
    %5 = vector.load %arg2[%c152, %c0_6] : memref<288x128xf32, #tpu.memory_space<vmem>>, vector<128x128xf32>
    %c280 = arith.constant 280 : index
    %c0_7 = arith.constant 0 : index
    %6 = vector.load %arg2[%c280, %c0_7] : memref<288x128xf32, #tpu.memory_space<vmem>>, vector<1x128xf32>
    %7 = tpu.iota {dimensions = array<i32: 1>} : vector<8x128xi32>
    %cst = arith.constant dense<0.000000e+00> : vector<8x128xf32>
    %8 = tpu.matmul %0, %1, %cst {dimension_numbers = #tpu.dot_dimension_numbers<[1], [0], [0], [1], [0, 0, 1, 1], [], []>} : vector<8x4xf32>, vector<4x128xf32>, vector<8x128xf32> -> vector<8x128xf32>
    %9 = vector.broadcast %2 : vector<1x128xf32> to vector<8x128xf32>
    %10 = arith.addf %8, %9 : vector<8x128xf32>
    %c64_i32 = arith.constant 64 : i32
    %11 = vector.broadcast %c64_i32 : i32 to vector<8x128xi32>
    %12 = arith.cmpi slt, %7, %11 : vector<8x128xi32>
    %13 = math.tanh %10 : vector<8x128xf32>
    %cst_8 = arith.constant 0.000000e+00 : f32
    %14 = vector.broadcast %cst_8 : f32 to vector<8x128xf32>
    %15 = arith.maximumf %10, %14 : vector<8x128xf32>
    %16 = arith.select %12, %13, %15 : vector<8x128xi1>, vector<8x128xf32>
    %cst_9 = arith.constant dense<0.000000e+00> : vector<8x128xf32>
    %17 = tpu.matmul %16, %3, %cst_9 {dimension_numbers = #tpu.dot_dimension_numbers<[1], [0], [0], [1], [0, 0, 1, 1], [], []>} : vector<8x128xf32>, vector<128x128xf32>, vector<8x128xf32> -> vector<8x128xf32>
    %18 = vector.broadcast %4 : vector<1x128xf32> to vector<8x128xf32>
    %19 = arith.addf %17, %18 : vector<8x128xf32>
    %c32_i32 = arith.constant 32 : i32
    %20 = vector.broadcast %c32_i32 : i32 to vector<8x128xi32>
    %21 = arith.cmpi slt, %7, %20 : vector<8x128xi32>
    %22 = math.tanh %19 : vector<8x128xf32>
    %cst_10 = arith.constant 0.000000e+00 : f32
    %23 = vector.broadcast %cst_10 : f32 to vector<8x128xf32>
    %24 = arith.maximumf %19, %23 : vector<8x128xf32>
    %25 = arith.select %21, %22, %24 : vector<8x128xi1>, vector<8x128xf32>
    %cst_11 = arith.constant dense<0.000000e+00> : vector<8x128xf32>
    %26 = tpu.matmul %25, %5, %cst_11 {dimension_numbers = #tpu.dot_dimension_numbers<[1], [0], [0], [1], [0, 0, 1, 1], [], []>} : vector<8x128xf32>, vector<128x128xf32>, vector<8x128xf32> -> vector<8x128xf32>
    %27 = vector.broadcast %6 : vector<1x128xf32> to vector<8x128xf32>
    %28 = arith.addf %26, %27 : vector<8x128xf32>
    %c6_i32 = arith.constant 6 : i32
    %29 = vector.broadcast %c6_i32 : i32 to vector<8x128xi32>
    %30 = arith.cmpi slt, %7, %29 : vector<8x128xi32>
    %cst_12 = arith.constant 0xFF800000 : f32
    %31 = vector.broadcast %cst_12 : f32 to vector<8x128xf32>
    %32 = arith.select %30, %28, %31 : vector<8x128xi1>, vector<8x128xf32>
    %cst_13 = arith.constant dense<0xFF800000> : vector<8xf32>
    %33 = vector.multi_reduction <maximumf>, %32, %cst_13 [1] : vector<8x128xf32> to vector<8xf32>
    %34 = vector.shape_cast %33 : vector<8xf32> to vector<8x1xf32>
    %35 = vector.broadcast %34 : vector<8x1xf32> to vector<8x128xf32>
    %36 = arith.subf %32, %35 : vector<8x128xf32>
    %37 = math.exp %36 : vector<8x128xf32>
    %cst_14 = arith.constant dense<0.000000e+00> : vector<8xf32>
    %38 = vector.multi_reduction <add>, %37, %cst_14 [1] : vector<8x128xf32> to vector<8xf32>
    %39 = vector.shape_cast %38 : vector<8xf32> to vector<8x1xf32>
    %40 = tpu.reciprocal %39 : vector<8x1xf32> -> vector<8x1xf32>
    %41 = vector.broadcast %40 : vector<8x1xf32> to vector<8x128xf32>
    %42 = arith.mulf %37, %41 : vector<8x128xf32>
    %c6_i32_15 = arith.constant 6 : i32
    %43 = vector.broadcast %c6_i32_15 : i32 to vector<8x128xi32>
    %44 = arith.cmpi eq, %7, %43 : vector<8x128xi32>
    %cst_16 = arith.constant 0.000000e+00 : f32
    %45 = vector.broadcast %cst_16 : f32 to vector<8x128xf32>
    %46 = arith.select %44, %28, %45 : vector<8x128xi1>, vector<8x128xf32>
    %47 = arith.addf %42, %46 : vector<8x128xf32>
    %c0_17 = arith.constant 0 : index
    %c0_18 = arith.constant 0 : index
    %48 = vector.load %arg3[%c0_17, %c0_18] : memref<8x128xf32, #tpu.memory_space<vmem>>, vector<8x128xf32>
    tpu.vector_store %arg3[%c0_17, %c0_18], %47 {strides = array<i32>} : memref<8x128xf32, #tpu.memory_space<vmem>>, vector<8x128xf32>,
    return
  }
  func.func @transform_0(%arg0: i32) -> (i32, i32) {
    %c0_i32 = arith.constant 0 : i32
    %c0_i32_0 = arith.constant 0 : i32
    return %arg0, %c0_i32 : i32, i32
  }
  func.func @transform_1(%arg0: i32) -> (i32, i32) {
    %c0_i32 = arith.constant 0 : i32
    %c0_i32_0 = arith.constant 0 : i32
    %c0_i32_1 = arith.constant 0 : i32
    return %c0_i32, %c0_i32_0 : i32, i32
  }
  func.func @transform_2(%arg0: i32) -> (i32, i32) {
    %c0_i32 = arith.constant 0 : i32
    %c0_i32_0 = arith.constant 0 : i32
    return %arg0, %c0_i32 : i32, i32
  }
}

</mosaic_0001>

<llo_original>
// kernel: tpu_custom_call.1
$region0: #{tpu_custom_call.1}
  #allocation0 [shape = 'u32[]', space=smem, size = 0x4, offset = 0x4, fixed_abs, tag = 'smem constant byte address 0x4 - core index']
  #allocation1 [shape = 'u32[144,128]{1,0:T(1,128)}', space=vmem, size = 0x12000, scoped, tag = 'internal scratch']
  %s0 = inlined_call_operand.vmem [shape: f32[8,4], index: 0, kind: input, shape index: {}]
  %s1 = inlined_call_operand.hbm [shape: f32[288,128], index: 1, kind: input, shape index: {}]
  %s2 = inlined_call_operand.hbm [shape: f32[8,128], index: 2, kind: output, shape index: {}]
  %s3 = sld [smem:[#allocation0]]
  $region22: #{tpu_custom_call.1} parent=0
    _
  %s5 = ssub.s32 1, %s3
  %s6 = scalar_select 0, %s5, %s3
  $region1: #{tpu_custom_call.1} parent=0
    #allocation2 [shape = 'u8[147456]{0}', space=vmem, size = 0x24000, scoped, tag = 'input window, operand 1, single buffered']
    #allocation3 [shape = 's32[1]{0}', space=sflag, size = 0x4, scoped, tag = 'scoped memory for tpu_custom_call.1']
    #allocation4 [shape = 's32[1]{0}', space=sflag, size = 0x4, scoped, tag = 'scoped memory for tpu_custom_call.1']
    #allocation5 [shape = 'u8[4096]{0}', space=vmem, size = 0x1000, scoped, tag = 'output window, operand 0, single buffered']
    %7 = vsyncpa [#allocation3], 0
    %8 = vsyncpa [#allocation4], 0
    // Predicated region
    $region2: #{tpu_custom_call.1} parent=1 // pred_check
      _
    $region3: #{tpu_custom_call.1} parent=1 // pred_check_branch
      %10 = sbr.rel (0) target = $region5
    $region4: #{tpu_custom_call.1} parent=1 // pred_region
      _
    $region5: #{tpu_custom_call.1} parent=1 // pred_fallthru
      _
    // Predicated region
    $region6: #{tpu_custom_call.1} parent=1 // pred_check
      _
    $region7: #{tpu_custom_call.1} parent=1 // pred_check_branch
      %12 = sbr.rel (0) target = $region9
    $region8: #{tpu_custom_call.1} parent=1 // pred_region
      %s14 = ssub.s32 4608, 4608
      %15 = vsyncadd [#allocation3], %s14
      %s16 = sshll.u32 [#allocation2], 4
      %s17 = int_to_ptr.vmem [resolvable:$true] %s16
      %22 = dma.hbm_to_vmem [thread:$0]  %s1, 4608, %s17, [#allocation3], 128, 128, 8
    $region9: #{tpu_custom_call.1} parent=1 // pred_fallthru
      _
    // Predicated region
    $region10: #{tpu_custom_call.1} parent=1 // pred_check
      _
    $region11: #{tpu_custom_call.1} parent=1 // pred_check_branch
      %24 = sbr.rel (0) target = $region13
    $region12: #{tpu_custom_call.1} parent=1 // pred_region
      %25 = dma.done [#allocation3], 4608
    $region13: #{tpu_custom_call.1} parent=1 // pred_fallthru
      _
    %v26 = vld [vmem:[%s0] sm:$0xff]
    %v27 = vld [vmem:[#allocation2] sm:$0xf]
    %v28 = vld [vmem:[#allocation2 + $0x8] sm:$0x1]
    %v29 = vld [vmem:[#allocation2 + $0x10] sm:$0xff]
    %v30 = vld [vmem:[#allocation2 + $0x18] sm:$0xff]
    %v31 = vld [vmem:[#allocation2 + $0x20] sm:$0xff]
    %v32 = vld [vmem:[#allocation2 + $0x28] sm:$0xff]
    %v33 = vld [vmem:[#allocation2 + $0x30] sm:$0xff]
    %v34 = vld [vmem:[#allocation2 + $0x38] sm:$0xff]
    %v35 = vld [vmem:[#allocation2 + $0x40] sm:$0xff]
    %v36 = vld [vmem:[#allocation2 + $0x48] sm:$0xff]
    %v37 = vld [vmem:[#allocation2 + $0x50] sm:$0xff]
    %v38 = vld [vmem:[#allocation2 + $0x58] sm:$0xff]
    %v39 = vld [vmem:[#allocation2 + $0x60] sm:$0xff]
    %v40 = vld [vmem:[#allocation2 + $0x68] sm:$0xff]
    %v41 = vld [vmem:[#allocation2 + $0x70] sm:$0xff]
    %v42 = vld [vmem:[#allocation2 + $0x78] sm:$0xff]
    %v43 = vld [vmem:[#allocation2 + $0x80] sm:$0xff]
    %v44 = vld [vmem:[#allocation2 + $0x88] sm:$0xff]
    %v45 = vld [vmem:[#allocation2 + $0x90] sm:$0x1]
    %v46 = vld [vmem:[#allocation2 + $0x98] sm:$0xff]
    %v47 = vld [vmem:[#allocation2 + $0xa0] sm:$0xff]
    %v48 = vld [vmem:[#allocation2 + $0xa8] sm:$0xff]
    %v49 = vld [vmem:[#allocation2 + $0xb0] sm:$0xff]
    %v50 = vld [vmem:[#allocation2 + $0xb8] sm:$0xff]
    %v51 = vld [vmem:[#allocation2 + $0xc0] sm:$0xff]
    %v52 = vld [vmem:[#allocation2 + $0xc8] sm:$0xff]
    %v53 = vld [vmem:[#allocation2 + $0xd0] sm:$0xff]
    %v54 = vld [vmem:[#allocation2 + $0xd8] sm:$0xff]
    %v55 = vld [vmem:[#allocation2 + $0xe0] sm:$0xff]
    %v56 = vld [vmem:[#allocation2 + $0xe8] sm:$0xff]
    %v57 = vld [vmem:[#allocation2 + $0xf0] sm:$0xff]
    %v58 = vld [vmem:[#allocation2 + $0xf8] sm:$0xff]
    %v59 = vld [vmem:[#allocation2 + $0x100] sm:$0xff]
    %v60 = vld [vmem:[#allocation2 + $0x108] sm:$0xff]
    %v61 = vld [vmem:[#allocation2 + $0x110] sm:$0xff]
    %v62 = vld [vmem:[#allocation2 + $0x118] sm:$0x1]
    %v63 = vlaneseq
    %v64 = vand.u32 %v63, 127
    %v65 = vlaneseq
    %v66 = vshrl.u32 %v65, 7
    %v67 = vsub.s32 0, %v66
    %v68 = vrot.slane %v28, %v67
    %vm69 = vcmask 31744
    %v71 = vsel %vm69, %v26, 0
    %vm73 = vcmask 1043456
    %v75 = vsel %vm73, %v27, 0
    %77 = vmatprep.subr.mxu0 0.0
    %78 = vmatpush1.msra.mxu0 %v75
    %79 = vmatprep.subr.mxu0 0.0
    %80 = vmatpush1.msra.mxu0 0.0
    %81 = vmatprep.subr.mxu0 0.0
    %82 = vmatpush1.msra.mxu0 0.0
    %83 = vmatprep.subr.mxu0 0.0
    %84 = vmatpush1.msra.mxu0 0.0
    %85 = vmatprep.subr.mxu0 0.0
    %86 = vmatpush1.msra.mxu0 0.0
    %87 = vmatprep.subr.mxu0 0.0
    %88 = vmatpush1.msra.mxu0 0.0
    %89 = vmatprep.subr.mxu0 0.0
    %90 = vmatpush1.msra.mxu0 0.0
    %91 = vmatprep.subr.mxu0 0.0
    %92 = vmatpush1.msra.mxu0 0.0
    %93 = vmatprep.subr.mxu0 0.0
    %94 = vmatpush1.msra.mxu0 0.0
    %95 = vmatprep.subr.mxu0 0.0
    %96 = vmatpush1.msra.mxu0 0.0
    %97 = vmatprep.subr.mxu0 0.0
    %98 = vmatpush1.msra.mxu0 0.0
    %99 = vmatprep.subr.mxu0 0.0
    %100 = vmatpush1.msra.mxu0 0.0
    %101 = vmatprep.subr.mxu0 0.0
    %102 = vmatpush1.msra.mxu0 0.0
    %103 = vmatprep.subr.mxu0 0.0
    %104 = vmatpush1.msra.mxu0 0.0
    %105 = vmatprep.subr.mxu0 0.0
    %106 = vmatpush1.msra.mxu0 0.0
    %107 = vmatprep.subr.mxu0 0.0
    %108 = vmatpush1.msra.mxu0 0.0
    %109 = vmatprep.subr.mxu0 0.0
    %110 = vmatpush1.msra.mxu0 0.0
    %111 = vmatprep.subr.mxu0 0.0
    %112 = vmatpush1.msra.mxu0 0.0
    %113 = vmatprep.subr.mxu0 0.0
    %114 = vmatpush1.msra.mxu0 0.0
    %115 = vmatprep.subr.mxu0 0.0
    %116 = vmatpush1.msra.mxu0 0.0
    %117 = vmatprep.subr.mxu0 0.0
    %118 = vmatpush1.msra.mxu0 0.0
    %119 = vmatprep.subr.mxu0 0.0
    %120 = vmatpush1.msra.mxu0 0.0
    %121 = vmatprep.subr.mxu0 0.0
    %122 = vmatpush1.msra.mxu0 0.0
    %123 = vmatprep.subr.mxu0 0.0
    %124 = vmatpush1.msra.mxu0 0.0
    %125 = vmatprep.subr.mxu0 0.0
    %126 = vmatpush1.msra.mxu0 0.0
    %127 = vmatprep.subr.mxu0 0.0
    %128 = vmatpush1.msra.mxu0 0.0
    %129 = vmatprep.subr.mxu0 0.0
    %130 = vmatpush1.msra.mxu0 0.0
    %131 = vmatprep.subr.mxu0 0.0
    %132 = vmatpush1.msra.mxu0 0.0
    %133 = vmatprep.subr.mxu0 0.0
    %134 = vmatpush1.msra.mxu0 0.0
    %135 = vmatprep.subr.mxu0 0.0
    %136 = vmatpush1.msra.mxu0 0.0
    %137 = vmatprep.subr.mxu0 0.0
    %138 = vmatpush1.msra.mxu0 0.0
    %139 = vmatprep.subr.mxu0 0.0
    %140 = vmatpush1.msra.mxu0 0.0
    %141 = vmatprep.mubr.f32.mxu0 0.0
    %142 = vmatmul.mubr.f32.gmra.mrb[0].mxu0 %v71
    %v143 = vpop.f32.mrb[0].mxu0
    %v144 = vadd.f32 %v68, %v143
    %v145 = vpop.f32.mrb[0].mxu0
    %146 = vdwg.mxu0
    %vm147 = vcmp.lt.s32.totalorder %v64, 64
    %v148 = vtanh.pop %v144
    %v149 = vmax.f32 %v144, 0.0
    %v150 = vsel %vm147, %v148, %v149
    %v151 = vlaneseq
    %v152 = vshrl.u32 %v151, 7
    %v153 = vsub.s32 0, %v152
    %v154 = vrot.slane %v45, %v153
    %155 = vmatprep.subr.mxu0 0.0
    %156 = vmatpush1.msra.mxu0 %v29
    %157 = vmatprep.subr.mxu0 0.0
    %158 = vmatpush1.msra.mxu0 %v30
    %159 = vmatprep.subr.mxu0 0.0
    %160 = vmatpush1.msra.mxu0 %v31
    %161 = vmatprep.subr.mxu0 0.0
    %162 = vmatpush1.msra.mxu0 %v32
    %163 = vmatprep.subr.mxu0 0.0
    %164 = vmatpush1.msra.mxu0 %v33
    %165 = vmatprep.subr.mxu0 0.0
    %166 = vmatpush1.msra.mxu0 %v34
    %167 = vmatprep.subr.mxu0 0.0
    %168 = vmatpush1.msra.mxu0 %v35
    %169 = vmatprep.subr.mxu0 0.0
    %170 = vmatpush1.msra.mxu0 %v36
    %171 = vmatprep.subr.mxu0 0.0
    %172 = vmatpush1.msra.mxu0 %v37
    %173 = vmatprep.subr.mxu0 0.0
    %174 = vmatpush1.msra.mxu0 %v38
    %175 = vmatprep.subr.mxu0 0.0
    %176 = vmatpush1.msra.mxu0 %v39
    %177 = vmatprep.subr.mxu0 0.0
    %178 = vmatpush1.msra.mxu0 %v40
    %179 = vmatprep.subr.mxu0 0.0
    %180 = vmatpush1.msra.mxu0 %v41
    %181 = vmatprep.subr.mxu0 0.0
    %182 = vmatpush1.msra.mxu0 %v42
    %183 = vmatprep.subr.mxu0 0.0
    %184 = vmatpush1.msra.mxu0 %v43
    %185 = vmatprep.subr.mxu0 0.0
    %186 = vmatpush1.msra.mxu0 %v44
    %187 = vmatprep.subr.mxu0 0.0
    %188 = vmatpush1.msra.mxu0 0.0
    %189 = vmatprep.subr.mxu0 0.0
    %190 = vmatpush1.msra.mxu0 0.0
    %191 = vmatprep.subr.mxu0 0.0
    %192 = vmatpush1.msra.mxu0 0.0
    %193 = vmatprep.subr.mxu0 0.0
    %194 = vmatpush1.msra.mxu0 0.0
    %195 = vmatprep.subr.mxu0 0.0
    %196 = vmatpush1.msra.mxu0 0.0
    %197 = vmatprep.subr.mxu0 0.0
    %198 = vmatpush1.msra.mxu0 0.0
    %199 = vmatprep.subr.mxu0 0.0
    %200 = vmatpush1.msra.mxu0 0.0
    %201 = vmatprep.subr.mxu0 0.0
    %202 = vmatpush1.msra.mxu0 0.0
    %203 = vmatprep.subr.mxu0 0.0
    %204 = vmatpush1.msra.mxu0 0.0
    %205 = vmatprep.subr.mxu0 0.0
    %206 = vmatpush1.msra.mxu0 0.0
    %207 = vmatprep.subr.mxu0 0.0
    %208 = vmatpush1.msra.mxu0 0.0
    %209 = vmatprep.subr.mxu0 0.0
    %210 = vmatpush1.msra.mxu0 0.0
    %211 = vmatprep.subr.mxu0 0.0
    %212 = vmatpush1.msra.mxu0 0.0
    %213 = vmatprep.subr.mxu0 0.0
    %214 = vmatpush1.msra.mxu0 0.0
    %215 = vmatprep.subr.mxu0 0.0
    %216 = vmatpush1.msra.mxu0 0.0
    %217 = vmatprep.subr.mxu0 0.0
    %218 = vmatpush1.msra.mxu0 0.0
    %219 = vmatprep.mubr.f32.mxu0 0.0
    %220 = vmatmul.mubr.f32.gmra.mrb[0].mxu0 %v150
    %v221 = vpop.f32.mrb[0].mxu0
    %v222 = vadd.f32 %v154, %v221
    %v223 = vpop.f32.mrb[0].mxu0
    %224 = vdwg.mxu0
    %vm225 = vcmp.lt.s32.totalorder %v64, 32
    %v226 = vtanh.pop %v222
    %v227 = vmax.f32 %v222, 0.0
    %v228 = vsel %vm225, %v226, %v227
    %v229 = vlaneseq
    %v230 = vshrl.u32 %v229, 7
    %v231 = vsub.s32 0, %v230
    %v232 = vrot.slane %v62, %v231
    %233 = vmatprep.subr.mxu0 0.0
    %234 = vmatpush1.msra.mxu0 %v46
    %235 = vmatprep.subr.mxu0 0.0
    %236 = vmatpush1.msra.mxu0 %v47
    %237 = vmatprep.subr.mxu0 0.0
    %238 = vmatpush1.msra.mxu0 %v48
    %239 = vmatprep.subr.mxu0 0.0
    %240 = vmatpush1.msra.mxu0 %v49
    %241 = vmatprep.subr.mxu0 0.0
    %242 = vmatpush1.msra.mxu0 %v50
    %243 = vmatprep.subr.mxu0 0.0
    %244 = vmatpush1.msra.mxu0 %v51
    %245 = vmatprep.subr.mxu0 0.0
    %246 = vmatpush1.msra.mxu0 %v52
    %247 = vmatprep.subr.mxu0 0.0
    %248 = vmatpush1.msra.mxu0 %v53
    %249 = vmatprep.subr.mxu0 0.0
    %250 = vmatpush1.msra.mxu0 %v54
    %251 = vmatprep.subr.mxu0 0.0
    %252 = vmatpush1.msra.mxu0 %v55
    %253 = vmatprep.subr.mxu0 0.0
    %254 = vmatpush1.msra.mxu0 %v56
    %255 = vmatprep.subr.mxu0 0.0
    %256 = vmatpush1.msra.mxu0 %v57
    %257 = vmatprep.subr.mxu0 0.0
    %258 = vmatpush1.msra.mxu0 %v58
    %259 = vmatprep.subr.mxu0 0.0
    %260 = vmatpush1.msra.mxu0 %v59
    %261 = vmatprep.subr.mxu0 0.0
    %262 = vmatpush1.msra.mxu0 %v60
    %263 = vmatprep.subr.mxu0 0.0
    %264 = vmatpush1.msra.mxu0 %v61
    %265 = vmatprep.subr.mxu0 0.0
    %266 = vmatpush1.msra.mxu0 0.0
    %267 = vmatprep.subr.mxu0 0.0
    %268 = vmatpush1.msra.mxu0 0.0
    %269 = vmatprep.subr.mxu0 0.0
    %270 = vmatpush1.msra.mxu0 0.0
    %271 = vmatprep.subr.mxu0 0.0
    %272 = vmatpush1.msra.mxu0 0.0
    %273 = vmatprep.subr.mxu0 0.0
    %274 = vmatpush1.msra.mxu0 0.0
    %275 = vmatprep.subr.mxu0 0.0
    %276 = vmatpush1.msra.mxu0 0.0
    %277 = vmatprep.subr.mxu0 0.0
    %278 = vmatpush1.msra.mxu0 0.0
    %279 = vmatprep.subr.mxu0 0.0
    %280 = vmatpush1.msra.mxu0 0.0
    %281 = vmatprep.subr.mxu0 0.0
    %282 = vmatpush1.msra.mxu0 0.0
    %283 = vmatprep.subr.mxu0 0.0
    %284 = vmatpush1.msra.mxu0 0.0
    %285 = vmatprep.subr.mxu0 0.0
    %286 = vmatpush1.msra.mxu0 0.0
    %287 = vmatprep.subr.mxu0 0.0
    %288 = vmatpush1.msra.mxu0 0.0
    %289 = vmatprep.subr.mxu0 0.0
    %290 = vmatpush1.msra.mxu0 0.0
    %291 = vmatprep.subr.mxu0 0.0
    %292 = vmatpush1.msra.mxu0 0.0
    %293 = vmatprep.subr.mxu0 0.0
    %294 = vmatpush1.msra.mxu0 0.0
    %295 = vmatprep.subr.mxu0 0.0
    %296 = vmatpush1.msra.mxu0 0.0
    %297 = vmatprep.mubr.f32.mxu0 0.0
    %298 = vmatmul.mubr.f32.gmra.mrb[0].mxu0 %v228
    %v299 = vpop.f32.mrb[0].mxu0
    %v300 = vadd.f32 %v232, %v299
    %v301 = vpop.f32.mrb[0].mxu0
    %302 = vdwg.mxu0
    %vm303 = vcmp.lt.s32.totalorder %v64, 6
    %v304 = vsel %vm303, %v300, -inf
    %305 = vmax.xlane.f32.xlu0 %v304
    %v306 = vpop.xlane.xlu0 %305
    %v307 = vsub.f32 %v304, %v306
    %v308 = vmul.f32 %v307, 1.442695
    %v309 = vpow.pop %v308
    %310 = vadd.xlane.f32.xlu0 %v309
    %v311 = vpop.xlane.xlu0 %310
    %v312 = vrcp.pop %v311
    %v313 = vmul.f32 %v309, %v312
    %vm314 = vcmp.eq.s32.totalorder %v64, 6
    %v315 = vsel %vm314, %v300, 0.0
    %v316 = vadd.f32 %v313, %v315
    %317 = vst [vmem:[#allocation5] sm:$0xff] %v316
    // Predicated region
    $region14: #{tpu_custom_call.1} parent=1 // pred_check
      _
    $region15: #{tpu_custom_call.1} parent=1 // pred_check_branch
      %319 = sbr.rel (0) target = $region17
    $region16: #{tpu_custom_call.1} parent=1 // pred_region
      %s321 = ssub.s32 128, 128
      %322 = vsyncadd [#allocation4], %s321
      %s324 = sshll.u32 [#allocation5], 4
      %s325 = int_to_ptr.vmem [resolvable:$true] %s324
      %327 = dma.vmem_to_hbm [thread:$0]  %s325, 128, %s2, [#allocation4]
    $region17: #{tpu_custom_call.1} parent=1 // pred_fallthru
      _
    // Predicated region
    $region18: #{tpu_custom_call.1} parent=1 // pred_check
      _
    $region19: #{tpu_custom_call.1} parent=1 // pred_check_branch
      %329 = sbr.rel (0) target = $region21
    $region20: #{tpu_custom_call.1} parent=1 // pred_region
      %330 = dma.done [#allocation4], 128
    $region21: #{tpu_custom_call.1} parent=1 // pred_fallthru
      _
    %331 = vsyncpa [#allocation3], 1
    %332 = vsyncpa [#allocation4], 1

</llo_original>
